<compile_context>
chip_gen: v7x
topology: tpu7x:2x2x1
jax: 0.10.0
libtpu: 0.0.40
codegen_flags: <defaults>
</compile_context>

<pallas_src>
import functools

import jax
import jax.numpy as jnp
from jax.experimental import pallas as pl
from jax.experimental.pallas import tpu as pltpu

EPS = 1e-6


def _round_up(x, m):
    return (x + m - 1) // m * m


def _num_tensorcores():
    """Best-effort guess of TensorCores per chip (2 on v7x, else 1)."""
    try:
        kind = jax.devices()[0].device_kind.lower()
        if "v7" in kind:
            return 2
    except Exception:
        pass
    return 1


def _auto_block_m(batch, num_cores=1, cap=512):
    """Pick the batch tile.

    Single-core parts (v5e/v6e): one big step (capped) -- extra grid steps only
    add per-step overhead.  Dual-core parts (v7x): aim for >= 2 parallel steps
    so both TensorCores get work.  Prefer a tile that divides the (8-rounded)
    batch so no row padding is needed and steps are balanced.
    """
    batch8 = _round_up(batch, 8)
    if num_cores >= 2 and batch8 >= 16:
        target = max(8, batch8 // 2)
    else:
        target = batch8
    bm = min(_round_up(target, 8), cap)
    d = bm
    while d > 8 and batch8 % d != 0:
        d -= 8
    if batch8 % d == 0:
        bm = d
    return max(8, bm)


def _layernorm_torchstyle(h, gamma, beta, n_real, lane_mask):
    """Torch-style LN over the last dim, reducing only the first n_real lanes.

    Padded lanes of `h` are exactly zero by construction (zero-padded weight
    columns and bias), so the plain row-sum already equals the sum over the
    real lanes; only the squared-diff sum needs masking.
    """
    mean = jnp.sum(h, axis=-1, keepdims=True) * (1.0 / n_real)
    diff = h - mean
    sq = diff * diff
    if lane_mask is not None:
        sq = jnp.where(lane_mask, sq, 0.0)
    var = jnp.sum(sq, axis=-1, keepdims=True) * (1.0 / (n_real - 1))
    denom = jnp.sqrt(var) + EPS          # (bm, 1) column
    inv = 1.0 / denom                    # exact f32 divide, narrow column
    return gamma * (diff * inv) + beta


def _embed_kernel(x_ref, w1_ref, p1_ref, w2_ref, p2_ref, o_ref, *, n1, n2):
    l1p = w1_ref.shape[1]
    l2p = w2_ref.shape[1]

    x = x_ref[...]
    p1 = p1_ref[...]                     # (3, l1p): bias / gamma / beta
    p2 = p2_ref[...]                     # (3, l2p): bias / gamma / beta

    # ---- layer 1: linear -> LN -> tanh -------------------------------------
    h = jnp.dot(x, w1_ref[...], preferred_element_type=jnp.float32) + p1[0:1, :]
    mask1 = None
    if l1p != n1:
        mask1 = jax.lax.broadcasted_iota(jnp.int32, (1, l1p), 1) < n1
    h = _layernorm_torchstyle(h, p1[1:2, :], p1[2:3, :], n1, mask1)
    h = jnp.tanh(h)

    # ---- layer 2: linear -> LN -> tanh -------------------------------------
    h2 = jnp.dot(h, w2_ref[...], preferred_element_type=jnp.float32) + p2[0:1, :]
    mask2 = None
    if l2p != n2:
        mask2 = jax.lax.broadcasted_iota(jnp.int32, (1, l2p), 1) < n2
    h2 = _layernorm_torchstyle(h2, p2[1:2, :], p2[2:3, :], n2, mask2)
    h2 = jnp.tanh(h2)

    o_ref[...] = h2.astype(o_ref.dtype)


def prepare_params(params):
    """One-time padding & packing (hoisted out of the per-call forward).

    params = (w1, b1, g1, be1, w2, b2, g2, be2) with weights pre-transposed:
      w1: [state_dim, l1], w2: [l1, l2]; vectors are [F].
    Returns pre-padded arrays plus the real (unpadded) hidden sizes.
    """
    w1, b1, g1, be1, w2, b2, g2, be2 = params
    state_dim, l1 = w1.shape
    l2 = w2.shape[1]
    l1p = _round_up(l1, 128)             # 400 -> 512: full, unmasked vregs
    l2p = _round_up(l2, 128)             # 128 -> 128: lane-dense output

    w1p = jnp.zeros((state_dim, l1p), jnp.float32).at[:, :l1].set(w1)
    w2p = jnp.zeros((l1p, l2p), jnp.float32).at[:l1, :l2].set(w2)

    def pack(b, g, be, fp):
        f = b.shape[0]
        p = jnp.zeros((3, fp), jnp.float32)
        p = p.at[0, :f].set(b)
        p = p.at[1, :f].set(g)
        p = p.at[2, :f].set(be)
        return p

    p1 = pack(b1, g1, be1, l1p)
    p2 = pack(b2, g2, be2, l2p)
    return w1p, p1, w2p, p2, l1, l2


@functools.partial(jax.jit, static_argnames=("n1", "n2", "block_m"))
def shared_state_embedding_fwd(state, w1p, p1, w2p, p2, *, n1, n2, block_m=None):
    """state: [B, state_dim] f32 -> [B, l2] f32 (params pre-padded/packed)."""
    B, state_dim = state.shape
    l1p = w1p.shape[1]
    l2p = w2p.shape[1]

    if block_m is None:
        block_m = _auto_block_m(B, _num_tensorcores())

    bp = _round_up(B, block_m)
    x = state
    if bp != B:
        x = jnp.zeros((bp, state_dim), state.dtype).at[:B].set(state)

    grid = (bp // block_m,)
    kernel = functools.partial(_embed_kernel, n1=n1, n2=n2)

    out = pl.pallas_call(
        kernel,
        out_shape=jax.ShapeDtypeStruct((bp, l2p), jnp.float32),
        grid_spec=pltpu.PrefetchScalarGridSpec(
            num_scalar_prefetch=0,
            grid=grid,
            in_specs=[
                pl.BlockSpec((block_m, state_dim), lambda i: (i, 0)),  # state
                pl.BlockSpec((state_dim, l1p), lambda i: (0, 0)),      # W1 (resident)
                pl.BlockSpec((3, l1p), lambda i: (0, 0)),              # b1/g1/be1
                pl.BlockSpec((l1p, l2p), lambda i: (0, 0)),            # W2 (resident)
                pl.BlockSpec((3, l2p), lambda i: (0, 0)),              # b2/g2/be2
            ],
            out_specs=pl.BlockSpec((block_m, l2p), lambda i: (i, 0)),
        ),
        compiler_params=pltpu.CompilerParams(
            dimension_semantics=("parallel",)),
    )(x, w1p, p1, w2p, p2)

    if bp != B or l2p != n2:
        out = out[:B, :n2]
    return out


def init_params(key, state_dim, l1, l2):
    """Deterministic init mirroring nn.Linear's U(-1/sqrt(fan_in), ...) scheme."""
    ks = jax.random.split(key, 4)
    lim1 = 1.0 / jnp.sqrt(jnp.float32(state_dim))
    lim2 = 1.0 / jnp.sqrt(jnp.float32(l1))
    w1 = jax.random.uniform(ks[0], (state_dim, l1), jnp.float32, -lim1, lim1)
    b1 = jax.random.uniform(ks[1], (l1,), jnp.float32, -lim1, lim1)
    w2 = jax.random.uniform(ks[2], (l1, l2), jnp.float32, -lim2, lim2)
    b2 = jax.random.uniform(ks[3], (l2,), jnp.float32, -lim2, lim2)
    g1 = jnp.ones((l1,), jnp.float32)
    be1 = jnp.zeros((l1,), jnp.float32)
    g2 = jnp.ones((l2,), jnp.float32)
    be2 = jnp.zeros((l2,), jnp.float32)
    return (w1, b1, g1, be1, w2, b2, g2, be2)


def _reference(state, params):
    w1, b1, g1, be1, w2, b2, g2, be2 = params

    def ln(x, g, b):
        mean = jnp.mean(x, axis=-1, keepdims=True)
        diff = x - mean
        var = jnp.sum(diff * diff, axis=-1, keepdims=True) / (x.shape[-1] - 1)
        return g * diff / (jnp.sqrt(var) + EPS) + b

    h = jnp.tanh(ln(state @ w1 + b1, g1, be1))
    return jnp.tanh(ln(h @ w2 + b2, g2, be2))


if __name__ == "__main__":
    # Shapes implied by the module: args.state_dim=32, l1=400 (fixed),
    # args.ls=128, args.use_ln=True.  Small batch for a quick smoke test.
    B, STATE_DIM, L1, L2 = 64, 32, 400, 128

    key = jax.random.PRNGKey(0)
    k_x, k_p = jax.random.split(key)
    state = jax.random.normal(k_x, (B, STATE_DIM), jnp.float32)
    params = init_params(k_p, STATE_DIM, L1, L2)

    # One-time parameter preparation (kept out of the hot forward path).
    w1p, p1, w2p, p2, n1, n2 = prepare_params(params)

    out = shared_state_embedding_fwd(state, w1p, p1, w2p, p2, n1=n1, n2=n2)
    out = jax.block_until_ready(out)

    ref = _reference(state, params)
    assert out.shape == (B, L2)
    err = float(jnp.max(jnp.abs(out - ref)))
    assert jnp.allclose(out, ref, atol=1e-5, rtol=1e-5), (
        "mismatch vs JAX reference: max abs err = %e" % err)

    print("KERNEL_OK")
</pallas_src>

<mosaic_0001>
module attributes {stable_mosaic.version = 11 : i64} {
  func.func @_embed_kernel(%arg0: i32, %arg1: memref<64x32xf32, #tpu.memory_space<vmem>>, %arg2: memref<32x512xf32, #tpu.memory_space<vmem>>, %arg3: memref<3x512xf32, #tpu.memory_space<vmem>>, %arg4: memref<512x128xf32, #tpu.memory_space<vmem>>, %arg5: memref<3x128xf32, #tpu.memory_space<vmem>>, %arg6: memref<64x128xf32, #tpu.memory_space<vmem>>) attributes {dimension_semantics = [#tpu.dimension_semantics<parallel>], iteration_bounds = array<i64: 1>, scalar_prefetch = 0 : i64, scratch_operands = 0 : i64, tpu.core_type = #tpu.core_type<tc>, window_params = [{transform_indices = @transform_0, window_bounds = array<i64: 64, 32>}, {pipeline_mode = #tpu.pipeline_mode<synchronous>, transform_indices = @transform_1, window_bounds = array<i64: 32, 512>}, {pipeline_mode = #tpu.pipeline_mode<synchronous>, transform_indices = @transform_2, window_bounds = array<i64: 3, 512>}, {pipeline_mode = #tpu.pipeline_mode<synchronous>, transform_indices = @transform_3, window_bounds = array<i64: 512, 128>}, {pipeline_mode = #tpu.pipeline_mode<synchronous>, transform_indices = @transform_4, window_bounds = array<i64: 3, 128>}, {transform_indices = @transform_5, window_bounds = array<i64: 64, 128>}]} {
    %c0 = arith.constant 0 : index
    %c0_0 = arith.constant 0 : index
    %0 = vector.load %arg1[%c0, %c0_0] : memref<64x32xf32, #tpu.memory_space<vmem>>, vector<64x32xf32>
    %c0_1 = arith.constant 0 : index
    %c0_2 = arith.constant 0 : index
    %1 = vector.load %arg3[%c0_1, %c0_2] : memref<3x512xf32, #tpu.memory_space<vmem>>, vector<3x512xf32>
    %c0_3 = arith.constant 0 : index
    %c0_4 = arith.constant 0 : index
    %2 = vector.load %arg5[%c0_3, %c0_4] : memref<3x128xf32, #tpu.memory_space<vmem>>, vector<3x128xf32>
    %c0_5 = arith.constant 0 : index
    %c0_6 = arith.constant 0 : index
    %3 = vector.load %arg2[%c0_5, %c0_6] : memref<32x512xf32, #tpu.memory_space<vmem>>, vector<32x512xf32>
    %cst = arith.constant dense<0.000000e+00> : vector<64x512xf32>
    %4 = tpu.matmul %0, %3, %cst {dimension_numbers = #tpu.dot_dimension_numbers<[1], [0], [0], [1], [0, 0, 1, 1], [], []>} : vector<64x32xf32>, vector<32x512xf32>, vector<64x512xf32> -> vector<64x512xf32>
    %5 = vector.extract_strided_slice %1 {offsets = [0, 0], sizes = [1, 512], strides = [1, 1]} : vector<3x512xf32> to vector<1x512xf32>
    %6 = vector.broadcast %5 : vector<1x512xf32> to vector<64x512xf32>
    %7 = arith.addf %4, %6 : vector<64x512xf32>
    %8 = tpu.iota {dimensions = array<i32: 1>} : vector<1x512xi32>
    %c400_i32 = arith.constant 400 : i32
    %9 = vector.broadcast %c400_i32 : i32 to vector<1x512xi32>
    %10 = arith.cmpi slt, %8, %9 : vector<1x512xi32>
    %11 = vector.extract_strided_slice %1 {offsets = [1, 0], sizes = [1, 512], strides = [1, 1]} : vector<3x512xf32> to vector<1x512xf32>
    %12 = vector.extract_strided_slice %1 {offsets = [2, 0], sizes = [1, 512], strides = [1, 1]} : vector<3x512xf32> to vector<1x512xf32>
    %cst_7 = arith.constant dense<0.000000e+00> : vector<64xf32>
    %13 = vector.multi_reduction <add>, %7, %cst_7 [1] : vector<64x512xf32> to vector<64xf32>
    %14 = vector.shape_cast %13 : vector<64xf32> to vector<64x1xf32>
    %cst_8 = arith.constant 2.500000e-03 : f32
    %15 = vector.broadcast %cst_8 : f32 to vector<64x1xf32>
    %16 = arith.mulf %14, %15 : vector<64x1xf32>
    %17 = vector.broadcast %16 : vector<64x1xf32> to vector<64x512xf32>
    %18 = arith.subf %7, %17 : vector<64x512xf32>
    %19 = arith.mulf %18, %18 : vector<64x512xf32>
    %cst_9 = arith.constant 0.000000e+00 : f32
    %20 = vector.shape_cast %10 : vector<1x512xi1> to vector<1x512xi1>
    %21 = vector.broadcast %20 : vector<1x512xi1> to vector<64x512xi1>
    %22 = vector.broadcast %cst_9 : f32 to vector<64x512xf32>
    %23 = arith.select %21, %19, %22 : vector<64x512xi1>, vector<64x512xf32>
    %cst_10 = arith.constant dense<0.000000e+00> : vector<64xf32>
    %24 = vector.multi_reduction <add>, %23, %cst_10 [1] : vector<64x512xf32> to vector<64xf32>
    %25 = vector.shape_cast %24 : vector<64xf32> to vector<64x1xf32>
    %cst_11 = arith.constant 0.00250626565 : f32
    %26 = vector.broadcast %cst_11 : f32 to vector<64x1xf32>
    %27 = arith.mulf %25, %26 : vector<64x1xf32>
    %28 = math.sqrt %27 : vector<64x1xf32>
    %cst_12 = arith.constant 9.99999997E-7 : f32
    %29 = vector.broadcast %cst_12 : f32 to vector<64x1xf32>
    %30 = arith.addf %28, %29 : vector<64x1xf32>
    %cst_13 = arith.constant 1.000000e+00 : f32
    %31 = vector.broadcast %cst_13 : f32 to vector<64x1xf32>
    %32 = arith.divf %31, %30 : vector<64x1xf32>
    %33 = vector.broadcast %32 : vector<64x1xf32> to vector<64x512xf32>
    %34 = arith.mulf %18, %33 : vector<64x512xf32>
    %35 = vector.broadcast %11 : vector<1x512xf32> to vector<64x512xf32>
    %36 = arith.mulf %35, %34 : vector<64x512xf32>
    %37 = vector.broadcast %12 : vector<1x512xf32> to vector<64x512xf32>
    %38 = arith.addf %36, %37 : vector<64x512xf32>
    %39 = math.tanh %38 : vector<64x512xf32>
    %c0_14 = arith.constant 0 : index
    %c0_15 = arith.constant 0 : index
    %40 = vector.load %arg4[%c0_14, %c0_15] : memref<512x128xf32, #tpu.memory_space<vmem>>, vector<512x128xf32>
    %cst_16 = arith.constant dense<0.000000e+00> : vector<64x128xf32>
    %41 = tpu.matmul %39, %40, %cst_16 {dimension_numbers = #tpu.dot_dimension_numbers<[1], [0], [0], [1], [0, 0, 1, 1], [], []>} : vector<64x512xf32>, vector<512x128xf32>, vector<64x128xf32> -> vector<64x128xf32>
    %42 = vector.extract_strided_slice %2 {offsets = [0, 0], sizes = [1, 128], strides = [1, 1]} : vector<3x128xf32> to vector<1x128xf32>
    %43 = vector.broadcast %42 : vector<1x128xf32> to vector<64x128xf32>
    %44 = arith.addf %41, %43 : vector<64x128xf32>
    %45 = vector.extract_strided_slice %2 {offsets = [1, 0], sizes = [1, 128], strides = [1, 1]} : vector<3x128xf32> to vector<1x128xf32>
    %46 = vector.extract_strided_slice %2 {offsets = [2, 0], sizes = [1, 128], strides = [1, 1]} : vector<3x128xf32> to vector<1x128xf32>
    %cst_17 = arith.constant dense<0.000000e+00> : vector<64xf32>
    %47 = vector.multi_reduction <add>, %44, %cst_17 [1] : vector<64x128xf32> to vector<64xf32>
    %48 = vector.shape_cast %47 : vector<64xf32> to vector<64x1xf32>
    %cst_18 = arith.constant 7.812500e-03 : f32
    %49 = vector.broadcast %cst_18 : f32 to vector<64x1xf32>
    %50 = arith.mulf %48, %49 : vector<64x1xf32>
    %51 = vector.broadcast %50 : vector<64x1xf32> to vector<64x128xf32>
    %52 = arith.subf %44, %51 : vector<64x128xf32>
    %53 = arith.mulf %52, %52 : vector<64x128xf32>
    %cst_19 = arith.constant dense<0.000000e+00> : vector<64xf32>
    %54 = vector.multi_reduction <add>, %53, %cst_19 [1] : vector<64x128xf32> to vector<64xf32>
    %55 = vector.shape_cast %54 : vector<64xf32> to vector<64x1xf32>
    %cst_20 = arith.constant 0.00787401571 : f32
    %56 = vector.broadcast %cst_20 : f32 to vector<64x1xf32>
    %57 = arith.mulf %55, %56 : vector<64x1xf32>
    %58 = math.sqrt %57 : vector<64x1xf32>
    %cst_21 = arith.constant 9.99999997E-7 : f32
    %59 = vector.broadcast %cst_21 : f32 to vector<64x1xf32>
    %60 = arith.addf %58, %59 : vector<64x1xf32>
    %cst_22 = arith.constant 1.000000e+00 : f32
    %61 = vector.broadcast %cst_22 : f32 to vector<64x1xf32>
    %62 = arith.divf %61, %60 : vector<64x1xf32>
    %63 = vector.broadcast %62 : vector<64x1xf32> to vector<64x128xf32>
    %64 = arith.mulf %52, %63 : vector<64x128xf32>
    %65 = vector.broadcast %45 : vector<1x128xf32> to vector<64x128xf32>
    %66 = arith.mulf %65, %64 : vector<64x128xf32>
    %67 = vector.broadcast %46 : vector<1x128xf32> to vector<64x128xf32>
    %68 = arith.addf %66, %67 : vector<64x128xf32>
    %69 = math.tanh %68 : vector<64x128xf32>
    %c0_23 = arith.constant 0 : index
    %c0_24 = arith.constant 0 : index
    %70 = vector.load %arg6[%c0_23, %c0_24] : memref<64x128xf32, #tpu.memory_space<vmem>>, vector<64x128xf32>
    tpu.vector_store %arg6[%c0_23, %c0_24], %69 {strides = array<i32>} : memref<64x128xf32, #tpu.memory_space<vmem>>, vector<64x128xf32>,
    return
  }
  func.func @transform_0(%arg0: i32) -> (i32, i32) {
    %c0_i32 = arith.constant 0 : i32
    %c0_i32_0 = arith.constant 0 : i32
    return %arg0, %c0_i32 : i32, i32
  }
  func.func @transform_1(%arg0: i32) -> (i32, i32) {
    %c0_i32 = arith.constant 0 : i32
    %c0_i32_0 = arith.constant 0 : i32
    %c0_i32_1 = arith.constant 0 : i32
    return %c0_i32, %c0_i32_0 : i32, i32
  }
  func.func @transform_2(%arg0: i32) -> (i32, i32) {
    %c0_i32 = arith.constant 0 : i32
    %c0_i32_0 = arith.constant 0 : i32
    %c0_i32_1 = arith.constant 0 : i32
    return %c0_i32, %c0_i32_0 : i32, i32
  }
  func.func @transform_3(%arg0: i32) -> (i32, i32) {
    %c0_i32 = arith.constant 0 : i32
    %c0_i32_0 = arith.constant 0 : i32
    %c0_i32_1 = arith.constant 0 : i32
    return %c0_i32, %c0_i32_0 : i32, i32
  }
  func.func @transform_4(%arg0: i32) -> (i32, i32) {
    %c0_i32 = arith.constant 0 : i32
    %c0_i32_0 = arith.constant 0 : i32
    %c0_i32_1 = arith.constant 0 : i32
    return %c0_i32, %c0_i32_0 : i32, i32
  }
  func.func @transform_5(%arg0: i32) -> (i32, i32) {
    %c0_i32 = arith.constant 0 : i32
    %c0_i32_0 = arith.constant 0 : i32
    return %arg0, %c0_i32 : i32, i32
  }
}

</mosaic_0001>

<llo_original>
// kernel: shared_state_embedding_fwd.1
$region0: #{shared_state_embedding_fwd.1}
  #allocation0 [shape = 'u32[]', space=smem, size = 0x4, offset = 0x4, fixed_abs, tag = 'smem constant byte address 0x4 - core index']
  #allocation1 [shape = 'u32[144,128]{1,0:T(1,128)}', space=vmem, size = 0x12000, scoped, tag = 'internal scratch']
  %s0 = inlined_call_operand.vmem [shape: f32[64,32], index: 0, kind: input, shape index: {}]
  %s1 = inlined_call_operand.hbm [shape: f32[32,512], index: 1, kind: input, shape index: {}]
  %s2 = inlined_call_operand.vmem [shape: f32[3,512], index: 2, kind: input, shape index: {}]
  %s3 = inlined_call_operand.hbm [shape: f32[512,128], index: 3, kind: input, shape index: {}]
  %s4 = inlined_call_operand.vmem [shape: f32[3,128], index: 4, kind: input, shape index: {}]
  %s5 = inlined_call_operand.hbm [shape: f32[64,128], index: 5, kind: output, shape index: {}]
  %s6 = sld [smem:[#allocation0]]
  $region38: #{shared_state_embedding_fwd.1} parent=0
    _
  %s8 = ssub.s32 1, %s6
  %s9 = scalar_select 0, %s8, %s6
  $region1: #{shared_state_embedding_fwd.1} parent=0
    #allocation2 [shape = 'u8[65536]{0}', space=vmem, size = 0x10000, scoped, tag = 'input window, operand 1, single buffered']
    #allocation3 [shape = 's32[1]{0}', space=sflag, size = 0x4, scoped, tag = 'scoped memory for shared_state_embedding_fwd.1']
    #allocation4 [shape = 's32[1]{0}', space=sflag, size = 0x4, scoped, tag = 'scoped memory for shared_state_embedding_fwd.1']
    #allocation5 [shape = 'u8[262144]{0}', space=vmem, size = 0x40000, scoped, tag = 'input window, operand 3, single buffered']
    #allocation6 [shape = 's32[1]{0}', space=sflag, size = 0x4, scoped, tag = 'scoped memory for shared_state_embedding_fwd.1']
    #allocation7 [shape = 'u8[32768]{0}', space=vmem, size = 0x8000, scoped, tag = 'output window, operand 0, single buffered']
    %10 = vsyncpa [#allocation3], 0
    %11 = vsyncpa [#allocation6], 0
    %12 = vsyncpa [#allocation4], 0
    // Predicated region
    $region2: #{shared_state_embedding_fwd.1} parent=1 // pred_check
      _
    $region3: #{shared_state_embedding_fwd.1} parent=1 // pred_check_branch
      %14 = sbr.rel (0) target = $region5
    $region4: #{shared_state_embedding_fwd.1} parent=1 // pred_region
      _
    $region5: #{shared_state_embedding_fwd.1} parent=1 // pred_fallthru
      _
    // Predicated region
    $region6: #{shared_state_embedding_fwd.1} parent=1 // pred_check
      _
    $region7: #{shared_state_embedding_fwd.1} parent=1 // pred_check_branch
      %16 = sbr.rel (0) target = $region9
    $region8: #{shared_state_embedding_fwd.1} parent=1 // pred_region
      %s18 = ssub.s32 2048, 2048
      %19 = vsyncadd [#allocation3], %s18
      %s20 = sshll.u32 [#allocation2], 4
      %s21 = int_to_ptr.vmem [resolvable:$true] %s20
      %26 = dma.hbm_to_vmem [thread:$0]  %s1, 2048, %s21, [#allocation3], 512, 512, 32
    $region9: #{shared_state_embedding_fwd.1} parent=1 // pred_fallthru
      _
    // Predicated region
    $region10: #{shared_state_embedding_fwd.1} parent=1 // pred_check
      _
    $region11: #{shared_state_embedding_fwd.1} parent=1 // pred_check_branch
      %28 = sbr.rel (0) target = $region13
    $region12: #{shared_state_embedding_fwd.1} parent=1 // pred_region
      _
    $region13: #{shared_state_embedding_fwd.1} parent=1 // pred_fallthru
      _
    // Predicated region
    $region14: #{shared_state_embedding_fwd.1} parent=1 // pred_check
      _
    $region15: #{shared_state_embedding_fwd.1} parent=1 // pred_check_branch
      %30 = sbr.rel (0) target = $region17
    $region16: #{shared_state_embedding_fwd.1} parent=1 // pred_region
      %s32 = ssub.s32 8192, 8192
      %33 = vsyncadd [#allocation6], %s32
      %s34 = sshll.u32 [#allocation5], 4
      %s35 = int_to_ptr.vmem [resolvable:$true] %s34
      %40 = dma.hbm_to_vmem [thread:$0]  %s3, 8192, %s35, [#allocation6], 128, 128, 8
    $region17: #{shared_state_embedding_fwd.1} parent=1 // pred_fallthru
      _
    // Predicated region
    $region18: #{shared_state_embedding_fwd.1} parent=1 // pred_check
      _
    $region19: #{shared_state_embedding_fwd.1} parent=1 // pred_check_branch
      %42 = sbr.rel (0) target = $region21
    $region20: #{shared_state_embedding_fwd.1} parent=1 // pred_region
      _
    $region21: #{shared_state_embedding_fwd.1} parent=1 // pred_fallthru
      _
    // Predicated region
    $region22: #{shared_state_embedding_fwd.1} parent=1 // pred_check
      _
    $region23: #{shared_state_embedding_fwd.1} parent=1 // pred_check_branch
      %44 = sbr.rel (0) target = $region25
    $region24: #{shared_state_embedding_fwd.1} parent=1 // pred_region
      %45 = dma.done [#allocation3], 2048
    $region25: #{shared_state_embedding_fwd.1} parent=1 // pred_fallthru
      _
    // Predicated region
    $region26: #{shared_state_embedding_fwd.1} parent=1 // pred_check
      _
    $region27: #{shared_state_embedding_fwd.1} parent=1 // pred_check_branch
      %47 = sbr.rel (0) target = $region29
    $region28: #{shared_state_embedding_fwd.1} parent=1 // pred_region
      %48 = dma.done [#allocation6], 8192
    $region29: #{shared_state_embedding_fwd.1} parent=1 // pred_fallthru
      _
    %v49 = vld [vmem:[%s0] sm:$0xff]
    %v50 = vld [vmem:[%s0 + $0x8] sm:$0xff]
    %v51 = vld [vmem:[%s0 + $0x10] sm:$0xff]
    %v52 = vld [vmem:[%s0 + $0x18] sm:$0xff]
    %v53 = vld [vmem:[%s0 + $0x20] sm:$0xff]
    %v54 = vld [vmem:[%s0 + $0x28] sm:$0xff]
    %v55 = vld [vmem:[%s0 + $0x30] sm:$0xff]
    %v56 = vld [vmem:[%s0 + $0x38] sm:$0xff]
    %v57 = vld [vmem:[%s2] sm:$0x77]
    %v58 = vld [vmem:[%s2 + $0x8] sm:$0x77]
    %v59 = vld [vmem:[%s4] sm:$0x7]
    %v60 = vld [vmem:[#allocation2] sm:$0xff]
    %v61 = vld [vmem:[#allocation2 + $0x8] sm:$0xff]
    %v62 = vld [vmem:[#allocation2 + $0x10] sm:$0xff]
    %v63 = vld [vmem:[#allocation2 + $0x18] sm:$0xff]
    %v64 = vld [vmem:[#allocation2 + $0x20] sm:$0xff]
    %v65 = vld [vmem:[#allocation2 + $0x28] sm:$0xff]
    %v66 = vld [vmem:[#allocation2 + $0x30] sm:$0xff]
    %v67 = vld [vmem:[#allocation2 + $0x38] sm:$0xff]
    %v68 = vld [vmem:[#allocation2 + $0x40] sm:$0xff]
    %v69 = vld [vmem:[#allocation2 + $0x48] sm:$0xff]
    %v70 = vld [vmem:[#allocation2 + $0x50] sm:$0xff]
    %v71 = vld [vmem:[#allocation2 + $0x58] sm:$0xff]
    %v72 = vld [vmem:[#allocation2 + $0x60] sm:$0xff]
    %v73 = vld [vmem:[#allocation2 + $0x68] sm:$0xff]
    %v74 = vld [vmem:[#allocation2 + $0x70] sm:$0xff]
    %v75 = vld [vmem:[#allocation2 + $0x78] sm:$0xff]
    %v78 = vlaneseq
    %v79 = vshrl.u32 %v78, 7
    %v80 = vsub.s32 0, %v79
    %v81 = vrot.slane %v57, %v80
    %v82 = vlaneseq
    %v83 = vshrl.u32 %v82, 7
    %v84 = vsub.s32 4, %v83
    %v85 = vrot.slane %v57, %v84
    %v86 = vlaneseq
    %v87 = vshrl.u32 %v86, 7
    %v88 = vsub.s32 0, %v87
    %v89 = vrot.slane %v58, %v88
    %v90 = vlaneseq
    %v91 = vshrl.u32 %v90, 7
    %v92 = vsub.s32 4, %v91
    %v93 = vrot.slane %v58, %v92
    %v98 = vlaneseq
    %v99 = vshrl.u32 %v98, 7
    %v100 = vsub.s32 0, %v99
    %v101 = vrot.slane %v81, %v100
    %v102 = vlaneseq
    %v103 = vshrl.u32 %v102, 7
    %v104 = vsub.s32 0, %v103
    %v105 = vrot.slane %v85, %v104
    %v106 = vlaneseq
    %v107 = vshrl.u32 %v106, 7
    %v108 = vsub.s32 0, %v107
    %v109 = vrot.slane %v89, %v108
    %v110 = vlaneseq
    %v111 = vshrl.u32 %v110, 7
    %v112 = vsub.s32 0, %v111
    %v113 = vrot.slane %v93, %v112
    %vm114 = vcmask 261120
    %v116 = vsel %vm114, %v49, 0
    %v119 = vsel %vm114, %v50, 0
    %v122 = vsel %vm114, %v51, 0
    %v125 = vsel %vm114, %v52, 0
    %v128 = vsel %vm114, %v53, 0
    %v131 = vsel %vm114, %v54, 0
    %v134 = vsel %vm114, %v55, 0
    %v137 = vsel %vm114, %v56, 0
    %139 = vmatprep.subr.mxu0 %v61
    %140 = vmatpush1.msra.mxu0 %v60
    %141 = vmatprep.subr.mxu0 %v65
    %142 = vmatpush1.msra.mxu0 %v64
    %143 = vmatprep.subr.mxu0 %v69
    %144 = vmatpush1.msra.mxu0 %v68
    %145 = vmatprep.subr.mxu0 %v73
    %146 = vmatpush1.msra.mxu0 %v72
    %147 = vmatprep.subr.mxu0 0.0
    %148 = vmatpush1.msra.mxu0 0.0
    %149 = vmatprep.subr.mxu0 0.0
    %150 = vmatpush1.msra.mxu0 0.0
    %151 = vmatprep.subr.mxu0 0.0
    %152 = vmatpush1.msra.mxu0 0.0
    %153 = vmatprep.subr.mxu0 0.0
    %154 = vmatpush1.msra.mxu0 0.0
    %155 = vmatprep.subr.mxu0 0.0
    %156 = vmatpush1.msra.mxu0 0.0
    %157 = vmatprep.subr.mxu0 0.0
    %158 = vmatpush1.msra.mxu0 0.0
    %159 = vmatprep.subr.mxu0 0.0
    %160 = vmatpush1.msra.mxu0 0.0
    %161 = vmatprep.subr.mxu0 0.0
    %162 = vmatpush1.msra.mxu0 0.0
    %163 = vmatprep.subr.mxu0 0.0
    %164 = vmatpush1.msra.mxu0 0.0
    %165 = vmatprep.subr.mxu0 0.0
    %166 = vmatpush1.msra.mxu0 0.0
    %167 = vmatprep.subr.mxu0 0.0
    %168 = vmatpush1.msra.mxu0 0.0
    %169 = vmatprep.subr.mxu0 0.0
    %170 = vmatpush1.msra.mxu0 0.0
    %171 = vmatprep.subr.mxu0 0.0
    %172 = vmatpush1.msra.mxu0 0.0
    %173 = vmatprep.subr.mxu0 0.0
    %174 = vmatpush1.msra.mxu0 0.0
    %175 = vmatprep.subr.mxu0 0.0
    %176 = vmatpush1.msra.mxu0 0.0
    %177 = vmatprep.subr.mxu0 0.0
    %178 = vmatpush1.msra.mxu0 0.0
    %179 = vmatprep.subr.mxu0 0.0
    %180 = vmatpush1.msra.mxu0 0.0
    %181 = vmatprep.subr.mxu0 0.0
    %182 = vmatpush1.msra.mxu0 0.0
    %183 = vmatprep.subr.mxu0 0.0
    %184 = vmatpush1.msra.mxu0 0.0
    %185 = vmatprep.subr.mxu0 0.0
    %186 = vmatpush1.msra.mxu0 0.0
    %187 = vmatprep.subr.mxu0 0.0
    %188 = vmatpush1.msra.mxu0 0.0
    %189 = vmatprep.subr.mxu0 0.0
    %190 = vmatpush1.msra.mxu0 0.0
    %191 = vmatprep.subr.mxu0 0.0
    %192 = vmatpush1.msra.mxu0 0.0
    %193 = vmatprep.subr.mxu0 0.0
    %194 = vmatpush1.msra.mxu0 0.0
    %195 = vmatprep.subr.mxu0 0.0
    %196 = vmatpush1.msra.mxu0 0.0
    %197 = vmatprep.subr.mxu0 0.0
    %198 = vmatpush1.msra.mxu0 0.0
    %199 = vmatprep.subr.mxu0 0.0
    %200 = vmatpush1.msra.mxu0 0.0
    %201 = vmatprep.subr.mxu0 0.0
    %202 = vmatpush1.msra.mxu0 0.0
    %203 = vmatprep.mubr.f32.mxu0 0.0
    %204 = vmatmul.mubr.f32.gmra.mrb[0].mxu0 %v116
    %v205 = vpop.f32.mrb[0].mxu0
    %v206 = vadd.f32 %v101, %v205
    %v207 = vpop.f32.mrb[0].mxu0
    %v208 = vadd.f32 %v105, %v207
    %209 = vmatprep.mubr.f32.mxu0 0.0
    %210 = vmatmul.mubr.f32.gmra.mrb[0].mxu0 %v119
    %v211 = vpop.f32.mrb[0].mxu0
    %v212 = vadd.f32 %v101, %v211
    %v213 = vpop.f32.mrb[0].mxu0
    %v214 = vadd.f32 %v105, %v213
    %215 = vmatprep.mubr.f32.mxu0 0.0
    %216 = vmatmul.mubr.f32.gmra.mrb[0].mxu0 %v122
    %v217 = vpop.f32.mrb[0].mxu0
    %v218 = vadd.f32 %v101, %v217
    %v219 = vpop.f32.mrb[0].mxu0
    %v220 = vadd.f32 %v105, %v219
    %221 = vmatprep.mubr.f32.mxu0 0.0
    %222 = vmatmul.mubr.f32.gmra.mrb[0].mxu0 %v125
    %v223 = vpop.f32.mrb[0].mxu0
    %v224 = vadd.f32 %v101, %v223
    %v225 = vpop.f32.mrb[0].mxu0
    %v226 = vadd.f32 %v105, %v225
    %227 = vmatprep.mubr.f32.mxu0 0.0
    %228 = vmatmul.mubr.f32.gmra.mrb[0].mxu0 %v128
    %v229 = vpop.f32.mrb[0].mxu0
    %v230 = vadd.f32 %v101, %v229
    %v231 = vpop.f32.mrb[0].mxu0
    %v232 = vadd.f32 %v105, %v231
    %233 = vmatprep.mubr.f32.mxu0 0.0
    %234 = vmatmul.mubr.f32.gmra.mrb[0].mxu0 %v131
    %v235 = vpop.f32.mrb[0].mxu0
    %v236 = vadd.f32 %v101, %v235
    %v237 = vpop.f32.mrb[0].mxu0
    %v238 = vadd.f32 %v105, %v237
    %239 = vmatprep.mubr.f32.mxu0 0.0
    %240 = vmatmul.mubr.f32.gmra.mrb[0].mxu0 %v134
    %v241 = vpop.f32.mrb[0].mxu0
    %v242 = vadd.f32 %v101, %v241
    %v243 = vpop.f32.mrb[0].mxu0
    %v244 = vadd.f32 %v105, %v243
    %245 = vmatprep.mubr.f32.mxu0 0.0
    %246 = vmatmul.mubr.f32.gmra.mrb[0].mxu0 %v137
    %v247 = vpop.f32.mrb[0].mxu0
    %v248 = vadd.f32 %v101, %v247
    %v249 = vpop.f32.mrb[0].mxu0
    %v250 = vadd.f32 %v105, %v249
    %251 = vdwg.mxu0
    %252 = vmatprep.subr.mxu0 %v63
    %253 = vmatpush1.msra.mxu0 %v62
    %254 = vmatprep.subr.mxu0 %v67
    %255 = vmatpush1.msra.mxu0 %v66
    %256 = vmatprep.subr.mxu0 %v71
    %257 = vmatpush1.msra.mxu0 %v70
    %258 = vmatprep.subr.mxu0 %v75
    %259 = vmatpush1.msra.mxu0 %v74
    %260 = vmatprep.subr.mxu0 0.0
    %261 = vmatpush1.msra.mxu0 0.0
    %262 = vmatprep.subr.mxu0 0.0
    %263 = vmatpush1.msra.mxu0 0.0
    %264 = vmatprep.subr.mxu0 0.0
    %265 = vmatpush1.msra.mxu0 0.0
    %266 = vmatprep.subr.mxu0 0.0
    %267 = vmatpush1.msra.mxu0 0.0
    %268 = vmatprep.subr.mxu0 0.0
    %269 = vmatpush1.msra.mxu0 0.0
    %270 = vmatprep.subr.mxu0 0.0
    %271 = vmatpush1.msra.mxu0 0.0
    %272 = vmatprep.subr.mxu0 0.0
    %273 = vmatpush1.msra.mxu0 0.0
    %274 = vmatprep.subr.mxu0 0.0
    %275 = vmatpush1.msra.mxu0 0.0
    %276 = vmatprep.subr.mxu0 0.0
    %277 = vmatpush1.msra.mxu0 0.0
    %278 = vmatprep.subr.mxu0 0.0
    %279 = vmatpush1.msra.mxu0 0.0
    %280 = vmatprep.subr.mxu0 0.0
    %281 = vmatpush1.msra.mxu0 0.0
    %282 = vmatprep.subr.mxu0 0.0
    %283 = vmatpush1.msra.mxu0 0.0
    %284 = vmatprep.subr.mxu0 0.0
    %285 = vmatpush1.msra.mxu0 0.0
    %286 = vmatprep.subr.mxu0 0.0
    %287 = vmatpush1.msra.mxu0 0.0
    %288 = vmatprep.subr.mxu0 0.0
    %289 = vmatpush1.msra.mxu0 0.0
    %290 = vmatprep.subr.mxu0 0.0
    %291 = vmatpush1.msra.mxu0 0.0
    %292 = vmatprep.subr.mxu0 0.0
    %293 = vmatpush1.msra.mxu0 0.0
    %294 = vmatprep.subr.mxu0 0.0
    %295 = vmatpush1.msra.mxu0 0.0
    %296 = vmatprep.subr.mxu0 0.0
    %297 = vmatpush1.msra.mxu0 0.0
    %298 = vmatprep.subr.mxu0 0.0
    %299 = vmatpush1.msra.mxu0 0.0
    %300 = vmatprep.subr.mxu0 0.0
    %301 = vmatpush1.msra.mxu0 0.0
    %302 = vmatprep.subr.mxu0 0.0
    %303 = vmatpush1.msra.mxu0 0.0
    %304 = vmatprep.subr.mxu0 0.0
    %305 = vmatpush1.msra.mxu0 0.0
    %306 = vmatprep.subr.mxu0 0.0
    %307 = vmatpush1.msra.mxu0 0.0
    %308 = vmatprep.subr.mxu0 0.0
    %309 = vmatpush1.msra.mxu0 0.0
    %310 = vmatprep.subr.mxu0 0.0
    %311 = vmatpush1.msra.mxu0 0.0
    %312 = vmatprep.subr.mxu0 0.0
    %313 = vmatpush1.msra.mxu0 0.0
    %314 = vmatprep.subr.mxu0 0.0
    %315 = vmatpush1.msra.mxu0 0.0
    %316 = vmatprep.mubr.f32.mxu0 0.0
    %317 = vmatmul.mubr.f32.gmra.mrb[0].mxu0 %v116
    %v318 = vpop.f32.mrb[0].mxu0
    %v319 = vadd.f32 %v109, %v318
    %v320 = vpop.f32.mrb[0].mxu0
    %v321 = vadd.f32 %v113, %v320
    %322 = vmatprep.mubr.f32.mxu0 0.0
    %323 = vmatmul.mubr.f32.gmra.mrb[0].mxu0 %v119
    %v324 = vpop.f32.mrb[0].mxu0
    %v325 = vadd.f32 %v109, %v324
    %v326 = vpop.f32.mrb[0].mxu0
    %v327 = vadd.f32 %v113, %v326
    %328 = vmatprep.mubr.f32.mxu0 0.0
    %329 = vmatmul.mubr.f32.gmra.mrb[0].mxu0 %v122
    %v330 = vpop.f32.mrb[0].mxu0
    %v331 = vadd.f32 %v109, %v330
    %v332 = vpop.f32.mrb[0].mxu0
    %v333 = vadd.f32 %v113, %v332
    %334 = vmatprep.mubr.f32.mxu0 0.0
    %335 = vmatmul.mubr.f32.gmra.mrb[0].mxu0 %v125
    %v336 = vpop.f32.mrb[0].mxu0
    %v337 = vadd.f32 %v109, %v336
    %v338 = vpop.f32.mrb[0].mxu0
    %v339 = vadd.f32 %v113, %v338
    %340 = vmatprep.mubr.f32.mxu0 0.0
    %341 = vmatmul.mubr.f32.gmra.mrb[0].mxu0 %v128
    %v342 = vpop.f32.mrb[0].mxu0
    %v343 = vadd.f32 %v109, %v342
    %v344 = vpop.f32.mrb[0].mxu0
    %v345 = vadd.f32 %v113, %v344
    %346 = vmatprep.mubr.f32.mxu0 0.0
    %347 = vmatmul.mubr.f32.gmra.mrb[0].mxu0 %v131
    %v348 = vpop.f32.mrb[0].mxu0
    %v349 = vadd.f32 %v109, %v348
    %v350 = vpop.f32.mrb[0].mxu0
    %v351 = vadd.f32 %v113, %v350
    %352 = vmatprep.mubr.f32.mxu0 0.0
    %353 = vmatmul.mubr.f32.gmra.mrb[0].mxu0 %v134
    %v354 = vpop.f32.mrb[0].mxu0
    %v355 = vadd.f32 %v109, %v354
    %v356 = vpop.f32.mrb[0].mxu0
    %v357 = vadd.f32 %v113, %v356
    %358 = vmatprep.mubr.f32.mxu0 0.0
    %359 = vmatmul.mubr.f32.gmra.mrb[0].mxu0 %v137
    %v360 = vpop.f32.mrb[0].mxu0
    %v361 = vadd.f32 %v109, %v360
    %v362 = vpop.f32.mrb[0].mxu0
    %v363 = vadd.f32 %v113, %v362
    %364 = vdwg.mxu0
    %v365 = vlaneseq
    %v366 = vand.u32 %v365, 127
    %v367 = vadd.s32 %v366, 128
    %v368 = vadd.s32 %v366, 256
    %v369 = vadd.s32 %v366, 384
    %vm370 = vcmp.lt.s32.totalorder %v366, 400
    %vm371 = vcmp.lt.s32.totalorder %v367, 400
    %vm372 = vcmp.lt.s32.totalorder %v368, 400
    %vm373 = vcmp.lt.s32.totalorder %v369, 400
    %v374 = vadd.f32 %v206, %v208
    %v375 = vadd.f32 %v374, %v319
    %v376 = vadd.f32 %v375, %v321
    %377 = vadd.xlane.f32.xlu0 %v376
    %v378 = vpop.xlane.xlu0 %377
    %v379 = vadd.f32 %v212, %v214
    %v380 = vadd.f32 %v379, %v325
    %v381 = vadd.f32 %v380, %v327
    %382 = vadd.xlane.f32.xlu0 %v381
    %v383 = vpop.xlane.xlu0 %382
    %v384 = vadd.f32 %v218, %v220
    %v385 = vadd.f32 %v384, %v331
    %v386 = vadd.f32 %v385, %v333
    %387 = vadd.xlane.f32.xlu0 %v386
    %v388 = vpop.xlane.xlu0 %387
    %v389 = vadd.f32 %v224, %v226
    %v390 = vadd.f32 %v389, %v337
    %v391 = vadd.f32 %v390, %v339
    %392 = vadd.xlane.f32.xlu0 %v391
    %v393 = vpop.xlane.xlu0 %392
    %v394 = vadd.f32 %v230, %v232
    %v395 = vadd.f32 %v394, %v343
    %v396 = vadd.f32 %v395, %v345
    %397 = vadd.xlane.f32.xlu0 %v396
    %v398 = vpop.xlane.xlu0 %397
    %v399 = vadd.f32 %v236, %v238
    %v400 = vadd.f32 %v399, %v349
    %v401 = vadd.f32 %v400, %v351
    %402 = vadd.xlane.f32.xlu0 %v401
    %v403 = vpop.xlane.xlu0 %402
    %v404 = vadd.f32 %v242, %v244
    %v405 = vadd.f32 %v404, %v355
    %v406 = vadd.f32 %v405, %v357
    %407 = vadd.xlane.f32.xlu0 %v406
    %v408 = vpop.xlane.xlu0 %407
    %v409 = vadd.f32 %v248, %v250
    %v410 = vadd.f32 %v409, %v361
    %v411 = vadd.f32 %v410, %v363
    %412 = vadd.xlane.f32.xlu0 %v411
    %v413 = vpop.xlane.xlu0 %412
    %v414 = vmul.f32 %v378, 0.0025
    %v415 = vmul.f32 %v383, 0.0025
    %v416 = vmul.f32 %v388, 0.0025
    %v417 = vmul.f32 %v393, 0.0025
    %v418 = vmul.f32 %v398, 0.0025
    %v419 = vmul.f32 %v403, 0.0025
    %v420 = vmul.f32 %v408, 0.0025
    %v421 = vmul.f32 %v413, 0.0025
    %v422 = vsub.f32 %v206, %v414
    %v423 = vsub.f32 %v208, %v414
    %v424 = vsub.f32 %v319, %v414
    %v425 = vsub.f32 %v321, %v414
    %v426 = vsub.f32 %v212, %v415
    %v427 = vsub.f32 %v214, %v415
    %v428 = vsub.f32 %v325, %v415
    %v429 = vsub.f32 %v327, %v415
    %v430 = vsub.f32 %v218, %v416
    %v431 = vsub.f32 %v220, %v416
    %v432 = vsub.f32 %v331, %v416
    %v433 = vsub.f32 %v333, %v416
    %v434 = vsub.f32 %v224, %v417
    %v435 = vsub.f32 %v226, %v417
    %v436 = vsub.f32 %v337, %v417
    %v437 = vsub.f32 %v339, %v417
    %v438 = vsub.f32 %v230, %v418
    %v439 = vsub.f32 %v232, %v418
    %v440 = vsub.f32 %v343, %v418
    %v441 = vsub.f32 %v345, %v418
    %v442 = vsub.f32 %v236, %v419
    %v443 = vsub.f32 %v238, %v419
    %v444 = vsub.f32 %v349, %v419
    %v445 = vsub.f32 %v351, %v419
    %v446 = vsub.f32 %v242, %v420
    %v447 = vsub.f32 %v244, %v420
    %v448 = vsub.f32 %v355, %v420
    %v449 = vsub.f32 %v357, %v420
    %v450 = vsub.f32 %v248, %v421
    %v451 = vsub.f32 %v250, %v421
    %v452 = vsub.f32 %v361, %v421
    %v453 = vsub.f32 %v363, %v421
    %v454 = vmul.f32 %v422, %v422
    %v455 = vmul.f32 %v423, %v423
    %v456 = vmul.f32 %v424, %v424
    %v457 = vmul.f32 %v425, %v425
    %v458 = vmul.f32 %v426, %v426
    %v459 = vmul.f32 %v427, %v427
    %v460 = vmul.f32 %v428, %v428
    %v461 = vmul.f32 %v429, %v429
    %v462 = vmul.f32 %v430, %v430
    %v463 = vmul.f32 %v431, %v431
    %v464 = vmul.f32 %v432, %v432
    %v465 = vmul.f32 %v433, %v433
    %v466 = vmul.f32 %v434, %v434
    %v467 = vmul.f32 %v435, %v435
    %v468 = vmul.f32 %v436, %v436
    %v469 = vmul.f32 %v437, %v437
    %v470 = vmul.f32 %v438, %v438
    %v471 = vmul.f32 %v439, %v439
    %v472 = vmul.f32 %v440, %v440
    %v473 = vmul.f32 %v441, %v441
    %v474 = vmul.f32 %v442, %v442
    %v475 = vmul.f32 %v443, %v443
    %v476 = vmul.f32 %v444, %v444
    %v477 = vmul.f32 %v445, %v445
    %v478 = vmul.f32 %v446, %v446
    %v479 = vmul.f32 %v447, %v447
    %v480 = vmul.f32 %v448, %v448
    %v481 = vmul.f32 %v449, %v449
    %v482 = vmul.f32 %v450, %v450
    %v483 = vmul.f32 %v451, %v451
    %v484 = vmul.f32 %v452, %v452
    %v485 = vmul.f32 %v453, %v453
    %v486 = vsel %vm370, 1, 0
    %v487 = vsel %vm371, 1, 0
    %v488 = vsel %vm372, 1, 0
    %v489 = vsel %vm373, 1, 0
    %vm490 = vcmp.eq.s32.totalorder %v486, 1
    %vm491 = vcmp.eq.s32.totalorder %v487, 1
    %vm492 = vcmp.eq.s32.totalorder %v488, 1
    %vm493 = vcmp.eq.s32.totalorder %v489, 1
    %v494 = vsel %vm490, %v454, 0.0
    %v495 = vsel %vm491, %v455, 0.0
    %v496 = vsel %vm492, %v456, 0.0
    %v497 = vsel %vm493, %v457, 0.0
    %v498 = vsel %vm490, %v458, 0.0
    %v499 = vsel %vm491, %v459, 0.0
    %v500 = vsel %vm492, %v460, 0.0
    %v501 = vsel %vm493, %v461, 0.0
    %v502 = vsel %vm490, %v462, 0.0
    %v503 = vsel %vm491, %v463, 0.0
    %v504 = vsel %vm492, %v464, 0.0
    %v505 = vsel %vm493, %v465, 0.0
    %v506 = vsel %vm490, %v466, 0.0
    %v507 = vsel %vm491, %v467, 0.0
    %v508 = vsel %vm492, %v468, 0.0
    %v509 = vsel %vm493, %v469, 0.0
    %v510 = vsel %vm490, %v470, 0.0
    %v511 = vsel %vm491, %v471, 0.0
    %v512 = vsel %vm492, %v472, 0.0
    %v513 = vsel %vm493, %v473, 0.0
    %v514 = vsel %vm490, %v474, 0.0
    %v515 = vsel %vm491, %v475, 0.0
    %v516 = vsel %vm492, %v476, 0.0
    %v517 = vsel %vm493, %v477, 0.0
    %v518 = vsel %vm490, %v478, 0.0
    %v519 = vsel %vm491, %v479, 0.0
    %v520 = vsel %vm492, %v480, 0.0
    %v521 = vsel %vm493, %v481, 0.0
    %v522 = vsel %vm490, %v482, 0.0
    %v523 = vsel %vm491, %v483, 0.0
    %v524 = vsel %vm492, %v484, 0.0
    %v525 = vsel %vm493, %v485, 0.0
    %v526 = vadd.f32 %v494, %v495
    %v527 = vadd.f32 %v526, %v496
    %v528 = vadd.f32 %v527, %v497
    %529 = vadd.xlane.f32.xlu0 %v528
    %v530 = vpop.xlane.xlu0 %529
    %v531 = vadd.f32 %v498, %v499
    %v532 = vadd.f32 %v531, %v500
    %v533 = vadd.f32 %v532, %v501
    %534 = vadd.xlane.f32.xlu0 %v533
    %v535 = vpop.xlane.xlu0 %534
    %v536 = vadd.f32 %v502, %v503
    %v537 = vadd.f32 %v536, %v504
    %v538 = vadd.f32 %v537, %v505
    %539 = vadd.xlane.f32.xlu0 %v538
    %v540 = vpop.xlane.xlu0 %539
    %v541 = vadd.f32 %v506, %v507
    %v542 = vadd.f32 %v541, %v508
    %v543 = vadd.f32 %v542, %v509
    %544 = vadd.xlane.f32.xlu0 %v543
    %v545 = vpop.xlane.xlu0 %544
    %v546 = vadd.f32 %v510, %v511
    %v547 = vadd.f32 %v546, %v512
    %v548 = vadd.f32 %v547, %v513
    %549 = vadd.xlane.f32.xlu0 %v548
    %v550 = vpop.xlane.xlu0 %549
    %v551 = vadd.f32 %v514, %v515
    %v552 = vadd.f32 %v551, %v516
    %v553 = vadd.f32 %v552, %v517
    %554 = vadd.xlane.f32.xlu0 %v553
    %v555 = vpop.xlane.xlu0 %554
    %v556 = vadd.f32 %v518, %v519
    %v557 = vadd.f32 %v556, %v520
    %v558 = vadd.f32 %v557, %v521
    %559 = vadd.xlane.f32.xlu0 %v558
    %v560 = vpop.xlane.xlu0 %559
    %v561 = vadd.f32 %v522, %v523
    %v562 = vadd.f32 %v561, %v524
    %v563 = vadd.f32 %v562, %v525
    %564 = vadd.xlane.f32.xlu0 %v563
    %v565 = vpop.xlane.xlu0 %564
    %v566 = vmul.f32 %v530, 0.0025062656
    %v567 = vmul.f32 %v535, 0.0025062656
    %v568 = vmul.f32 %v540, 0.0025062656
    %v569 = vmul.f32 %v545, 0.0025062656
    %v570 = vmul.f32 %v550, 0.0025062656
    %v571 = vmul.f32 %v555, 0.0025062656
    %v572 = vmul.f32 %v560, 0.0025062656
    %v573 = vmul.f32 %v565, 0.0025062656
    %v574 = vrsqrt.pop %v566
    %v575 = vmul.f32 %v566, %v574
    %vm576 = vcmp.eq.f32.partialorder %v566, inf
    %v577 = vsel %vm576, %v566, %v575
    %vm578 = vcmp.eq.f32.partialorder %v566, 0.0
    %v579 = vand.u32 %v566, 2147483648
    %v580 = vsel %vm578, %v579, %v577
    %v581 = vrsqrt.pop %v567
    %v582 = vmul.f32 %v567, %v581
    %vm583 = vcmp.eq.f32.partialorder %v567, inf
    %v584 = vsel %vm583, %v567, %v582
    %vm585 = vcmp.eq.f32.partialorder %v567, 0.0
    %v586 = vand.u32 %v567, 2147483648
    %v587 = vsel %vm585, %v586, %v584
    %v588 = vrsqrt.pop %v568
    %v589 = vmul.f32 %v568, %v588
    %vm590 = vcmp.eq.f32.partialorder %v568, inf
    %v591 = vsel %vm590, %v568, %v589
    %vm592 = vcmp.eq.f32.partialorder %v568, 0.0
    %v593 = vand.u32 %v568, 2147483648
    %v594 = vsel %vm592, %v593, %v591
    %v595 = vrsqrt.pop %v569
    %v596 = vmul.f32 %v569, %v595
    %vm597 = vcmp.eq.f32.partialorder %v569, inf
    %v598 = vsel %vm597, %v569, %v596
    %vm599 = vcmp.eq.f32.partialorder %v569, 0.0
    %v600 = vand.u32 %v569, 2147483648
    %v601 = vsel %vm599, %v600, %v598
    %v602 = vrsqrt.pop %v570
    %v603 = vmul.f32 %v570, %v602
    %vm604 = vcmp.eq.f32.partialorder %v570, inf
    %v605 = vsel %vm604, %v570, %v603
    %vm606 = vcmp.eq.f32.partialorder %v570, 0.0
    %v607 = vand.u32 %v570, 2147483648
    %v608 = vsel %vm606, %v607, %v605
    %v609 = vrsqrt.pop %v571
    %v610 = vmul.f32 %v571, %v609
    %vm611 = vcmp.eq.f32.partialorder %v571, inf
    %v612 = vsel %vm611, %v571, %v610
    %vm613 = vcmp.eq.f32.partialorder %v571, 0.0
    %v614 = vand.u32 %v571, 2147483648
    %v615 = vsel %vm613, %v614, %v612
    %v616 = vrsqrt.pop %v572
    %v617 = vmul.f32 %v572, %v616
    %vm618 = vcmp.eq.f32.partialorder %v572, inf
    %v619 = vsel %vm618, %v572, %v617
    %vm620 = vcmp.eq.f32.partialorder %v572, 0.0
    %v621 = vand.u32 %v572, 2147483648
    %v622 = vsel %vm620, %v621, %v619
    %v623 = vrsqrt.pop %v573
    %v624 = vmul.f32 %v573, %v623
    %vm625 = vcmp.eq.f32.partialorder %v573, inf
    %v626 = vsel %vm625, %v573, %v624
    %vm627 = vcmp.eq.f32.partialorder %v573, 0.0
    %v628 = vand.u32 %v573, 2147483648
    %v629 = vsel %vm627, %v628, %v626
    %v630 = vadd.f32 %v580, 1e-06
    %v631 = vadd.f32 %v587, 1e-06
    %v632 = vadd.f32 %v594, 1e-06
    %v633 = vadd.f32 %v601, 1e-06
    %v634 = vadd.f32 %v608, 1e-06
    %v635 = vadd.f32 %v615, 1e-06
    %v636 = vadd.f32 %v622, 1e-06
    %v637 = vadd.f32 %v629, 1e-06
    %v638 = vrcp.pop %v630
    %v639 = vmul.f32 1.0, %v638
    %v640 = vrcp.pop %v631
    %v641 = vmul.f32 1.0, %v640
    %v642 = vrcp.pop %v632
    %v643 = vmul.f32 1.0, %v642
    %v644 = vrcp.pop %v633
    %v645 = vmul.f32 1.0, %v644
    %v646 = vrcp.pop %v634
    %v647 = vmul.f32 1.0, %v646
    %v648 = vrcp.pop %v635
    %v649 = vmul.f32 1.0, %v648
    %v650 = vrcp.pop %v636
    %v651 = vmul.f32 1.0, %v650
    %v652 = vrcp.pop %v637
    %v653 = vmul.f32 1.0, %v652
    %v654 = vmul.f32 %v422, %v639
    %v655 = vmul.f32 %v423, %v639
    %v656 = vmul.f32 %v424, %v639
    %v657 = vmul.f32 %v425, %v639
    %v658 = vmul.f32 %v426, %v641
    %v659 = vmul.f32 %v427, %v641
    %v660 = vmul.f32 %v428, %v641
    %v661 = vmul.f32 %v429, %v641
    %v662 = vmul.f32 %v430, %v643
    %v663 = vmul.f32 %v431, %v643
    %v664 = vmul.f32 %v432, %v643
    %v665 = vmul.f32 %v433, %v643
    %v666 = vmul.f32 %v434, %v645
    %v667 = vmul.f32 %v435, %v645
    %v668 = vmul.f32 %v436, %v645
    %v669 = vmul.f32 %v437, %v645
    %v670 = vmul.f32 %v438, %v647
    %v671 = vmul.f32 %v439, %v647
    %v672 = vmul.f32 %v440, %v647
    %v673 = vmul.f32 %v441, %v647
    %v674 = vmul.f32 %v442, %v649
    %v675 = vmul.f32 %v443, %v649
    %v676 = vmul.f32 %v444, %v649
    %v677 = vmul.f32 %v445, %v649
    %v678 = vmul.f32 %v446, %v651
    %v679 = vmul.f32 %v447, %v651
    %v680 = vmul.f32 %v448, %v651
    %v681 = vmul.f32 %v449, %v651
    %v682 = vmul.f32 %v450, %v653
    %v683 = vmul.f32 %v451, %v653
    %v684 = vmul.f32 %v452, %v653
    %v685 = vmul.f32 %v453, %v653
    %v686 = vlaneseq
    %v687 = vshrl.u32 %v686, 7
    %v688 = vsub.s32 1, %v687
    %v689 = vrot.slane %v57, %v688
    %v690 = vlaneseq
    %v691 = vshrl.u32 %v690, 7
    %v692 = vsub.s32 5, %v691
    %v693 = vrot.slane %v57, %v692
    %v694 = vlaneseq
    %v695 = vshrl.u32 %v694, 7
    %v696 = vsub.s32 1, %v695
    %v697 = vrot.slane %v58, %v696
    %v698 = vlaneseq
    %v699 = vshrl.u32 %v698, 7
    %v700 = vsub.s32 5, %v699
    %v701 = vrot.slane %v58, %v700
    %v706 = vlaneseq
    %v707 = vshrl.u32 %v706, 7
    %v708 = vsub.s32 1, %v707
    %v709 = vrot.slane %v689, %v708
    %v710 = vlaneseq
    %v711 = vshrl.u32 %v710, 7
    %v712 = vsub.s32 1, %v711
    %v713 = vrot.slane %v693, %v712
    %v714 = vlaneseq
    %v715 = vshrl.u32 %v714, 7
    %v716 = vsub.s32 1, %v715
    %v717 = vrot.slane %v697, %v716
    %v718 = vlaneseq
    %v719 = vshrl.u32 %v718, 7
    %v720 = vsub.s32 1, %v719
    %v721 = vrot.slane %v701, %v720
    %v722 = vmul.f32 %v709, %v654
    %v723 = vmul.f32 %v713, %v655
    %v724 = vmul.f32 %v717, %v656
    %v725 = vmul.f32 %v721, %v657
    %v726 = vmul.f32 %v709, %v658
    %v727 = vmul.f32 %v713, %v659
    %v728 = vmul.f32 %v717, %v660
    %v729 = vmul.f32 %v721, %v661
    %v730 = vmul.f32 %v709, %v662
    %v731 = vmul.f32 %v713, %v663
    %v732 = vmul.f32 %v717, %v664
    %v733 = vmul.f32 %v721, %v665
    %v734 = vmul.f32 %v709, %v666
    %v735 = vmul.f32 %v713, %v667
    %v736 = vmul.f32 %v717, %v668
    %v737 = vmul.f32 %v721, %v669
    %v738 = vmul.f32 %v709, %v670
    %v739 = vmul.f32 %v713, %v671
    %v740 = vmul.f32 %v717, %v672
    %v741 = vmul.f32 %v721, %v673
    %v742 = vmul.f32 %v709, %v674
    %v743 = vmul.f32 %v713, %v675
    %v744 = vmul.f32 %v717, %v676
    %v745 = vmul.f32 %v721, %v677
    %v746 = vmul.f32 %v709, %v678
    %v747 = vmul.f32 %v713, %v679
    %v748 = vmul.f32 %v717, %v680
    %v749 = vmul.f32 %v721, %v681
    %v750 = vmul.f32 %v709, %v682
    %v751 = vmul.f32 %v713, %v683
    %v752 = vmul.f32 %v717, %v684
    %v753 = vmul.f32 %v721, %v685
    %v754 = vlaneseq
    %v755 = vshrl.u32 %v754, 7
    %v756 = vsub.s32 2, %v755
    %v757 = vrot.slane %v57, %v756
    %v758 = vlaneseq
    %v759 = vshrl.u32 %v758, 7
    %v760 = vsub.s32 6, %v759
    %v761 = vrot.slane %v57, %v760
    %v762 = vlaneseq
    %v763 = vshrl.u32 %v762, 7
    %v764 = vsub.s32 2, %v763
    %v765 = vrot.slane %v58, %v764
    %v766 = vlaneseq
    %v767 = vshrl.u32 %v766, 7
    %v768 = vsub.s32 6, %v767
    %v769 = vrot.slane %v58, %v768
    %v774 = vlaneseq
    %v775 = vshrl.u32 %v774, 7
    %v776 = vsub.s32 2, %v775
    %v777 = vrot.slane %v757, %v776
    %v778 = vlaneseq
    %v779 = vshrl.u32 %v778, 7
    %v780 = vsub.s32 2, %v779
    %v781 = vrot.slane %v761, %v780
    %v782 = vlaneseq
    %v783 = vshrl.u32 %v782, 7
    %v784 = vsub.s32 2, %v783
    %v785 = vrot.slane %v765, %v784
    %v786 = vlaneseq
    %v787 = vshrl.u32 %v786, 7
    %v788 = vsub.s32 2, %v787
    %v789 = vrot.slane %v769, %v788
    %v790 = vadd.f32 %v722, %v777
    %v791 = vadd.f32 %v723, %v781
    %v792 = vadd.f32 %v724, %v785
    %v793 = vadd.f32 %v725, %v789
    %v794 = vadd.f32 %v726, %v777
    %v795 = vadd.f32 %v727, %v781
    %v796 = vadd.f32 %v728, %v785
    %v797 = vadd.f32 %v729, %v789
    %v798 = vadd.f32 %v730, %v777
    %v799 = vadd.f32 %v731, %v781
    %v800 = vadd.f32 %v732, %v785
    %v801 = vadd.f32 %v733, %v789
    %v802 = vadd.f32 %v734, %v777
    %v803 = vadd.f32 %v735, %v781
    %v804 = vadd.f32 %v736, %v785
    %v805 = vadd.f32 %v737, %v789
    %v806 = vadd.f32 %v738, %v777
    %v807 = vadd.f32 %v739, %v781
    %v808 = vadd.f32 %v740, %v785
    %v809 = vadd.f32 %v741, %v789
    %v810 = vadd.f32 %v742, %v777
    %v811 = vadd.f32 %v743, %v781
    %v812 = vadd.f32 %v744, %v785
    %v813 = vadd.f32 %v745, %v789
    %v814 = vadd.f32 %v746, %v777
    %v815 = vadd.f32 %v747, %v781
    %v816 = vadd.f32 %v748, %v785
    %v817 = vadd.f32 %v749, %v789
    %v818 = vadd.f32 %v750, %v777
    %v819 = vadd.f32 %v751, %v781
    %v820 = vadd.f32 %v752, %v785
    %v821 = vadd.f32 %v753, %v789
    %v822 = vtanh.pop %v790
    %v823 = vtanh.pop %v791
    %v824 = vtanh.pop %v792
    %v825 = vtanh.pop %v793
    %v826 = vtanh.pop %v794
    %v827 = vtanh.pop %v795
    %v828 = vtanh.pop %v796
    %v829 = vtanh.pop %v797
    %v830 = vtanh.pop %v798
    %v831 = vtanh.pop %v799
    %v832 = vtanh.pop %v800
    %v833 = vtanh.pop %v801
    %v834 = vtanh.pop %v802
    %v835 = vtanh.pop %v803
    %v836 = vtanh.pop %v804
    %v837 = vtanh.pop %v805
    %v838 = vtanh.pop %v806
    %v839 = vtanh.pop %v807
    %v840 = vtanh.pop %v808
    %v841 = vtanh.pop %v809
    %v842 = vtanh.pop %v810
    %v843 = vtanh.pop %v811
    %v844 = vtanh.pop %v812
    %v845 = vtanh.pop %v813
    %v846 = vtanh.pop %v814
    %v847 = vtanh.pop %v815
    %v848 = vtanh.pop %v816
    %v849 = vtanh.pop %v817
    %v850 = vtanh.pop %v818
    %v851 = vtanh.pop %v819
    %v852 = vtanh.pop %v820
    %v853 = vtanh.pop %v821
    %v854 = vld [vmem:[#allocation5] sm:$0xff]
    %v855 = vld [vmem:[#allocation5 + $0x8] sm:$0xff]
    %v856 = vld [vmem:[#allocation5 + $0x10] sm:$0xff]
    %v857 = vld [vmem:[#allocation5 + $0x18] sm:$0xff]
    %v858 = vld [vmem:[#allocation5 + $0x20] sm:$0xff]
    %v859 = vld [vmem:[#allocation5 + $0x28] sm:$0xff]
    %v860 = vld [vmem:[#allocation5 + $0x30] sm:$0xff]
    %v861 = vld [vmem:[#allocation5 + $0x38] sm:$0xff]
    %v862 = vld [vmem:[#allocation5 + $0x40] sm:$0xff]
    %v863 = vld [vmem:[#allocation5 + $0x48] sm:$0xff]
    %v864 = vld [vmem:[#allocation5 + $0x50] sm:$0xff]
    %v865 = vld [vmem:[#allocation5 + $0x58] sm:$0xff]
    %v866 = vld [vmem:[#allocation5 + $0x60] sm:$0xff]
    %v867 = vld [vmem:[#allocation5 + $0x68] sm:$0xff]
    %v868 = vld [vmem:[#allocation5 + $0x70] sm:$0xff]
    %v869 = vld [vmem:[#allocation5 + $0x78] sm:$0xff]
    %v870 = vld [vmem:[#allocation5 + $0x80] sm:$0xff]
    %v871 = vld [vmem:[#allocation5 + $0x88] sm:$0xff]
    %v872 = vld [vmem:[#allocation5 + $0x90] sm:$0xff]
    %v873 = vld [vmem:[#allocation5 + $0x98] sm:$0xff]
    %v874 = vld [vmem:[#allocation5 + $0xa0] sm:$0xff]
    %v875 = vld [vmem:[#allocation5 + $0xa8] sm:$0xff]
    %v876 = vld [vmem:[#allocation5 + $0xb0] sm:$0xff]
    %v877 = vld [vmem:[#allocation5 + $0xb8] sm:$0xff]
    %v878 = vld [vmem:[#allocation5 + $0xc0] sm:$0xff]
    %v879 = vld [vmem:[#allocation5 + $0xc8] sm:$0xff]
    %v880 = vld [vmem:[#allocation5 + $0xd0] sm:$0xff]
    %v881 = vld [vmem:[#allocation5 + $0xd8] sm:$0xff]
    %v882 = vld [vmem:[#allocation5 + $0xe0] sm:$0xff]
    %v883 = vld [vmem:[#allocation5 + $0xe8] sm:$0xff]
    %v884 = vld [vmem:[#allocation5 + $0xf0] sm:$0xff]
    %v885 = vld [vmem:[#allocation5 + $0xf8] sm:$0xff]
    %v886 = vld [vmem:[#allocation5 + $0x100] sm:$0xff]
    %v887 = vld [vmem:[#allocation5 + $0x108] sm:$0xff]
    %v888 = vld [vmem:[#allocation5 + $0x110] sm:$0xff]
    %v889 = vld [vmem:[#allocation5 + $0x118] sm:$0xff]
    %v890 = vld [vmem:[#allocation5 + $0x120] sm:$0xff]
    %v891 = vld [vmem:[#allocation5 + $0x128] sm:$0xff]
    %v892 = vld [vmem:[#allocation5 + $0x130] sm:$0xff]
    %v893 = vld [vmem:[#allocation5 + $0x138] sm:$0xff]
    %v894 = vld [vmem:[#allocation5 + $0x140] sm:$0xff]
    %v895 = vld [vmem:[#allocation5 + $0x148] sm:$0xff]
    %v896 = vld [vmem:[#allocation5 + $0x150] sm:$0xff]
    %v897 = vld [vmem:[#allocation5 + $0x158] sm:$0xff]
    %v898 = vld [vmem:[#allocation5 + $0x160] sm:$0xff]
    %v899 = vld [vmem:[#allocation5 + $0x168] sm:$0xff]
    %v900 = vld [vmem:[#allocation5 + $0x170] sm:$0xff]
    %v901 = vld [vmem:[#allocation5 + $0x178] sm:$0xff]
    %v902 = vld [vmem:[#allocation5 + $0x180] sm:$0xff]
    %v903 = vld [vmem:[#allocation5 + $0x188] sm:$0xff]
    %v904 = vld [vmem:[#allocation5 + $0x190] sm:$0xff]
    %v905 = vld [vmem:[#allocation5 + $0x198] sm:$0xff]
    %v906 = vld [vmem:[#allocation5 + $0x1a0] sm:$0xff]
    %v907 = vld [vmem:[#allocation5 + $0x1a8] sm:$0xff]
    %v908 = vld [vmem:[#allocation5 + $0x1b0] sm:$0xff]
    %v909 = vld [vmem:[#allocation5 + $0x1b8] sm:$0xff]
    %v910 = vld [vmem:[#allocation5 + $0x1c0] sm:$0xff]
    %v911 = vld [vmem:[#allocation5 + $0x1c8] sm:$0xff]
    %v912 = vld [vmem:[#allocation5 + $0x1d0] sm:$0xff]
    %v913 = vld [vmem:[#allocation5 + $0x1d8] sm:$0xff]
    %v914 = vld [vmem:[#allocation5 + $0x1e0] sm:$0xff]
    %v915 = vld [vmem:[#allocation5 + $0x1e8] sm:$0xff]
    %v916 = vld [vmem:[#allocation5 + $0x1f0] sm:$0xff]
    %v917 = vld [vmem:[#allocation5 + $0x1f8] sm:$0xff]
    %v918 = vlaneseq
    %v919 = vshrl.u32 %v918, 7
    %v920 = vsub.s32 0, %v919
    %v921 = vrot.slane %v59, %v920
    %922 = vmatprep.subr.mxu0 0.0
    %923 = vmatpush1.msra.mxu0 %v854
    %924 = vmatprep.subr.mxu0 0.0
    %925 = vmatpush1.msra.mxu0 %v855
    %926 = vmatprep.subr.mxu0 0.0
    %927 = vmatpush1.msra.mxu0 %v856
    %928 = vmatprep.subr.mxu0 0.0
    %929 = vmatpush1.msra.mxu0 %v857
    %930 = vmatprep.subr.mxu0 0.0
    %931 = vmatpush1.msra.mxu0 %v858
    %932 = vmatprep.subr.mxu0 0.0
    %933 = vmatpush1.msra.mxu0 %v859
    %934 = vmatprep.subr.mxu0 0.0
    %935 = vmatpush1.msra.mxu0 %v860
    %936 = vmatprep.subr.mxu0 0.0
    %937 = vmatpush1.msra.mxu0 %v861
    %938 = vmatprep.subr.mxu0 0.0
    %939 = vmatpush1.msra.mxu0 %v862
    %940 = vmatprep.subr.mxu0 0.0
    %941 = vmatpush1.msra.mxu0 %v863
    %942 = vmatprep.subr.mxu0 0.0
    %943 = vmatpush1.msra.mxu0 %v864
    %944 = vmatprep.subr.mxu0 0.0
    %945 = vmatpush1.msra.mxu0 %v865
    %946 = vmatprep.subr.mxu0 0.0
    %947 = vmatpush1.msra.mxu0 %v866
    %948 = vmatprep.subr.mxu0 0.0
    %949 = vmatpush1.msra.mxu0 %v867
    %950 = vmatprep.subr.mxu0 0.0
    %951 = vmatpush1.msra.mxu0 %v868
    %952 = vmatprep.subr.mxu0 0.0
    %953 = vmatpush1.msra.mxu0 %v869
    %954 = vmatprep.subr.mxu0 0.0
    %955 = vmatpush1.msra.mxu0 %v870
    %956 = vmatprep.subr.mxu0 0.0
    %957 = vmatpush1.msra.mxu0 %v871
    %958 = vmatprep.subr.mxu0 0.0
    %959 = vmatpush1.msra.mxu0 %v872
    %960 = vmatprep.subr.mxu0 0.0
    %961 = vmatpush1.msra.mxu0 %v873
    %962 = vmatprep.subr.mxu0 0.0
    %963 = vmatpush1.msra.mxu0 %v874
    %964 = vmatprep.subr.mxu0 0.0
    %965 = vmatpush1.msra.mxu0 %v875
    %966 = vmatprep.subr.mxu0 0.0
    %967 = vmatpush1.msra.mxu0 %v876
    %968 = vmatprep.subr.mxu0 0.0
    %969 = vmatpush1.msra.mxu0 %v877
    %970 = vmatprep.subr.mxu0 0.0
    %971 = vmatpush1.msra.mxu0 %v878
    %972 = vmatprep.subr.mxu0 0.0
    %973 = vmatpush1.msra.mxu0 %v879
    %974 = vmatprep.subr.mxu0 0.0
    %975 = vmatpush1.msra.mxu0 %v880
    %976 = vmatprep.subr.mxu0 0.0
    %977 = vmatpush1.msra.mxu0 %v881
    %978 = vmatprep.subr.mxu0 0.0
    %979 = vmatpush1.msra.mxu0 %v882
    %980 = vmatprep.subr.mxu0 0.0
    %981 = vmatpush1.msra.mxu0 %v883
    %982 = vmatprep.subr.mxu0 0.0
    %983 = vmatpush1.msra.mxu0 %v884
    %984 = vmatprep.subr.mxu0 0.0
    %985 = vmatpush1.msra.mxu0 %v885
    %986 = vmatprep.mubr.f32.mxu0 %v823
    %987 = vmatmul.mubr.f32.gmra.mrb[0].mxu0 %v822
    %v988 = vpop.f32.mrb[0].mxu0
    %v989 = vadd.f32 %v921, %v988
    %v990 = vpop.f32.mrb[0].mxu0
    %991 = vmatprep.mubr.f32.mxu0 %v827
    %992 = vmatmul.mubr.f32.gmra.mrb[0].mxu0 %v826
    %v993 = vpop.f32.mrb[0].mxu0
    %v994 = vadd.f32 %v921, %v993
    %v995 = vpop.f32.mrb[0].mxu0
    %996 = vmatprep.mubr.f32.mxu0 %v831
    %997 = vmatmul.mubr.f32.gmra.mrb[0].mxu0 %v830
    %v998 = vpop.f32.mrb[0].mxu0
    %v999 = vadd.f32 %v921, %v998
    %v1000 = vpop.f32.mrb[0].mxu0
    %1001 = vmatprep.mubr.f32.mxu0 %v835
    %1002 = vmatmul.mubr.f32.gmra.mrb[0].mxu0 %v834
    %v1003 = vpop.f32.mrb[0].mxu0
    %v1004 = vadd.f32 %v921, %v1003
    %v1005 = vpop.f32.mrb[0].mxu0
    %1006 = vmatprep.mubr.f32.mxu0 %v839
    %1007 = vmatmul.mubr.f32.gmra.mrb[0].mxu0 %v838
    %v1008 = vpop.f32.mrb[0].mxu0
    %v1009 = vadd.f32 %v921, %v1008
    %v1010 = vpop.f32.mrb[0].mxu0
    %1011 = vmatprep.mubr.f32.mxu0 %v843
    %1012 = vmatmul.mubr.f32.gmra.mrb[0].mxu0 %v842
    %v1013 = vpop.f32.mrb[0].mxu0
    %v1014 = vadd.f32 %v921, %v1013
    %v1015 = vpop.f32.mrb[0].mxu0
    %1016 = vmatprep.mubr.f32.mxu0 %v847
    %1017 = vmatmul.mubr.f32.gmra.mrb[0].mxu0 %v846
    %v1018 = vpop.f32.mrb[0].mxu0
    %v1019 = vadd.f32 %v921, %v1018
    %v1020 = vpop.f32.mrb[0].mxu0
    %1021 = vmatprep.mubr.f32.mxu0 %v851
    %1022 = vmatmul.mubr.f32.gmra.mrb[0].mxu0 %v850
    %v1023 = vpop.f32.mrb[0].mxu0
    %v1024 = vadd.f32 %v921, %v1023
    %v1025 = vpop.f32.mrb[0].mxu0
    %1026 = vdwg.mxu0
    %1027 = vmatprep.subr.mxu0 0.0
    %1028 = vmatpush1.msra.mxu0 %v886
    %1029 = vmatprep.subr.mxu0 0.0
    %1030 = vmatpush1.msra.mxu0 %v887
    %1031 = vmatprep.subr.mxu0 0.0
    %1032 = vmatpush1.msra.mxu0 %v888
    %1033 = vmatprep.subr.mxu0 0.0
    %1034 = vmatpush1.msra.mxu0 %v889
    %1035 = vmatprep.subr.mxu0 0.0
    %1036 = vmatpush1.msra.mxu0 %v890
    %1037 = vmatprep.subr.mxu0 0.0
    %1038 = vmatpush1.msra.mxu0 %v891
    %1039 = vmatprep.subr.mxu0 0.0
    %1040 = vmatpush1.msra.mxu0 %v892
    %1041 = vmatprep.subr.mxu0 0.0
    %1042 = vmatpush1.msra.mxu0 %v893
    %1043 = vmatprep.subr.mxu0 0.0
    %1044 = vmatpush1.msra.mxu0 %v894
    %1045 = vmatprep.subr.mxu0 0.0
    %1046 = vmatpush1.msra.mxu0 %v895
    %1047 = vmatprep.subr.mxu0 0.0
    %1048 = vmatpush1.msra.mxu0 %v896
    %1049 = vmatprep.subr.mxu0 0.0
    %1050 = vmatpush1.msra.mxu0 %v897
    %1051 = vmatprep.subr.mxu0 0.0
    %1052 = vmatpush1.msra.mxu0 %v898
    %1053 = vmatprep.subr.mxu0 0.0
    %1054 = vmatpush1.msra.mxu0 %v899
    %1055 = vmatprep.subr.mxu0 0.0
    %1056 = vmatpush1.msra.mxu0 %v900
    %1057 = vmatprep.subr.mxu0 0.0
    %1058 = vmatpush1.msra.mxu0 %v901
    %1059 = vmatprep.subr.mxu0 0.0
    %1060 = vmatpush1.msra.mxu0 %v902
    %1061 = vmatprep.subr.mxu0 0.0
    %1062 = vmatpush1.msra.mxu0 %v903
    %1063 = vmatprep.subr.mxu0 0.0
    %1064 = vmatpush1.msra.mxu0 %v904
    %1065 = vmatprep.subr.mxu0 0.0
    %1066 = vmatpush1.msra.mxu0 %v905
    %1067 = vmatprep.subr.mxu0 0.0
    %1068 = vmatpush1.msra.mxu0 %v906
    %1069 = vmatprep.subr.mxu0 0.0
    %1070 = vmatpush1.msra.mxu0 %v907
    %1071 = vmatprep.subr.mxu0 0.0
    %1072 = vmatpush1.msra.mxu0 %v908
    %1073 = vmatprep.subr.mxu0 0.0
    %1074 = vmatpush1.msra.mxu0 %v909
    %1075 = vmatprep.subr.mxu0 0.0
    %1076 = vmatpush1.msra.mxu0 %v910
    %1077 = vmatprep.subr.mxu0 0.0
    %1078 = vmatpush1.msra.mxu0 %v911
    %1079 = vmatprep.subr.mxu0 0.0
    %1080 = vmatpush1.msra.mxu0 %v912
    %1081 = vmatprep.subr.mxu0 0.0
    %1082 = vmatpush1.msra.mxu0 %v913
    %1083 = vmatprep.subr.mxu0 0.0
    %1084 = vmatpush1.msra.mxu0 %v914
    %1085 = vmatprep.subr.mxu0 0.0
    %1086 = vmatpush1.msra.mxu0 %v915
    %1087 = vmatprep.subr.mxu0 0.0
    %1088 = vmatpush1.msra.mxu0 %v916
    %1089 = vmatprep.subr.mxu0 0.0
    %1090 = vmatpush1.msra.mxu0 %v917
    %1091 = vmatprep.mubr.f32.mxu0 %v825
    %1092 = vmatmul.mubr.f32.gmra.mrb[0].mxu0 %v824
    %v1093 = vpop.f32.mrb[0].mxu0
    %v1094 = vadd.f32 %v989, %v1093
    %v1095 = vpop.f32.mrb[0].mxu0
    %1096 = vmatprep.mubr.f32.mxu0 %v829
    %1097 = vmatmul.mubr.f32.gmra.mrb[0].mxu0 %v828
    %v1098 = vpop.f32.mrb[0].mxu0
    %v1099 = vadd.f32 %v994, %v1098
    %v1100 = vpop.f32.mrb[0].mxu0
    %1101 = vmatprep.mubr.f32.mxu0 %v833
    %1102 = vmatmul.mubr.f32.gmra.mrb[0].mxu0 %v832
    %v1103 = vpop.f32.mrb[0].mxu0
    %v1104 = vadd.f32 %v999, %v1103
    %v1105 = vpop.f32.mrb[0].mxu0
    %1106 = vmatprep.mubr.f32.mxu0 %v837
    %1107 = vmatmul.mubr.f32.gmra.mrb[0].mxu0 %v836
    %v1108 = vpop.f32.mrb[0].mxu0
    %v1109 = vadd.f32 %v1004, %v1108
    %v1110 = vpop.f32.mrb[0].mxu0
    %1111 = vmatprep.mubr.f32.mxu0 %v841
    %1112 = vmatmul.mubr.f32.gmra.mrb[0].mxu0 %v840
    %v1113 = vpop.f32.mrb[0].mxu0
    %v1114 = vadd.f32 %v1009, %v1113
    %v1115 = vpop.f32.mrb[0].mxu0
    %1116 = vmatprep.mubr.f32.mxu0 %v845
    %1117 = vmatmul.mubr.f32.gmra.mrb[0].mxu0 %v844
    %v1118 = vpop.f32.mrb[0].mxu0
    %v1119 = vadd.f32 %v1014, %v1118
    %v1120 = vpop.f32.mrb[0].mxu0
    %1121 = vmatprep.mubr.f32.mxu0 %v849
    %1122 = vmatmul.mubr.f32.gmra.mrb[0].mxu0 %v848
    %v1123 = vpop.f32.mrb[0].mxu0
    %v1124 = vadd.f32 %v1019, %v1123
    %v1125 = vpop.f32.mrb[0].mxu0
    %1126 = vmatprep.mubr.f32.mxu0 %v853
    %1127 = vmatmul.mubr.f32.gmra.mrb[0].mxu0 %v852
    %v1128 = vpop.f32.mrb[0].mxu0
    %v1129 = vadd.f32 %v1024, %v1128
    %v1130 = vpop.f32.mrb[0].mxu0
    %1131 = vdwg.mxu0
    %1132 = vadd.xlane.f32.xlu0 %v1094
    %v1133 = vpop.xlane.xlu0 %1132
    %1134 = vadd.xlane.f32.xlu0 %v1099
    %v1135 = vpop.xlane.xlu0 %1134
    %1136 = vadd.xlane.f32.xlu0 %v1104
    %v1137 = vpop.xlane.xlu0 %1136
    %1138 = vadd.xlane.f32.xlu0 %v1109
    %v1139 = vpop.xlane.xlu0 %1138
    %1140 = vadd.xlane.f32.xlu0 %v1114
    %v1141 = vpop.xlane.xlu0 %1140
    %1142 = vadd.xlane.f32.xlu0 %v1119
    %v1143 = vpop.xlane.xlu0 %1142
    %1144 = vadd.xlane.f32.xlu0 %v1124
    %v1145 = vpop.xlane.xlu0 %1144
    %1146 = vadd.xlane.f32.xlu0 %v1129
    %v1147 = vpop.xlane.xlu0 %1146
    %v1148 = vmul.f32 %v1133, 0.0078125
    %v1149 = vmul.f32 %v1135, 0.0078125
    %v1150 = vmul.f32 %v1137, 0.0078125
    %v1151 = vmul.f32 %v1139, 0.0078125
    %v1152 = vmul.f32 %v1141, 0.0078125
    %v1153 = vmul.f32 %v1143, 0.0078125
    %v1154 = vmul.f32 %v1145, 0.0078125
    %v1155 = vmul.f32 %v1147, 0.0078125
    %v1156 = vsub.f32 %v1094, %v1148
    %v1157 = vsub.f32 %v1099, %v1149
    %v1158 = vsub.f32 %v1104, %v1150
    %v1159 = vsub.f32 %v1109, %v1151
    %v1160 = vsub.f32 %v1114, %v1152
    %v1161 = vsub.f32 %v1119, %v1153
    %v1162 = vsub.f32 %v1124, %v1154
    %v1163 = vsub.f32 %v1129, %v1155
    %v1164 = vmul.f32 %v1156, %v1156
    %v1165 = vmul.f32 %v1157, %v1157
    %v1166 = vmul.f32 %v1158, %v1158
    %v1167 = vmul.f32 %v1159, %v1159
    %v1168 = vmul.f32 %v1160, %v1160
    %v1169 = vmul.f32 %v1161, %v1161
    %v1170 = vmul.f32 %v1162, %v1162
    %v1171 = vmul.f32 %v1163, %v1163
    %1172 = vadd.xlane.f32.xlu0 %v1164
    %v1173 = vpop.xlane.xlu0 %1172
    %1174 = vadd.xlane.f32.xlu0 %v1165
    %v1175 = vpop.xlane.xlu0 %1174
    %1176 = vadd.xlane.f32.xlu0 %v1166
    %v1177 = vpop.xlane.xlu0 %1176
    %1178 = vadd.xlane.f32.xlu0 %v1167
    %v1179 = vpop.xlane.xlu0 %1178
    %1180 = vadd.xlane.f32.xlu0 %v1168
    %v1181 = vpop.xlane.xlu0 %1180
    %1182 = vadd.xlane.f32.xlu0 %v1169
    %v1183 = vpop.xlane.xlu0 %1182
    %1184 = vadd.xlane.f32.xlu0 %v1170
    %v1185 = vpop.xlane.xlu0 %1184
    %1186 = vadd.xlane.f32.xlu0 %v1171
    %v1187 = vpop.xlane.xlu0 %1186
    %v1188 = vmul.f32 %v1173, 0.007874016
    %v1189 = vmul.f32 %v1175, 0.007874016
    %v1190 = vmul.f32 %v1177, 0.007874016
    %v1191 = vmul.f32 %v1179, 0.007874016
    %v1192 = vmul.f32 %v1181, 0.007874016
    %v1193 = vmul.f32 %v1183, 0.007874016
    %v1194 = vmul.f32 %v1185, 0.007874016
    %v1195 = vmul.f32 %v1187, 0.007874016
    %v1196 = vrsqrt.pop %v1188
    %v1197 = vmul.f32 %v1188, %v1196
    %vm1198 = vcmp.eq.f32.partialorder %v1188, inf
    %v1199 = vsel %vm1198, %v1188, %v1197
    %vm1200 = vcmp.eq.f32.partialorder %v1188, 0.0
    %v1201 = vand.u32 %v1188, 2147483648
    %v1202 = vsel %vm1200, %v1201, %v1199
    %v1203 = vrsqrt.pop %v1189
    %v1204 = vmul.f32 %v1189, %v1203
    %vm1205 = vcmp.eq.f32.partialorder %v1189, inf
    %v1206 = vsel %vm1205, %v1189, %v1204
    %vm1207 = vcmp.eq.f32.partialorder %v1189, 0.0
    %v1208 = vand.u32 %v1189, 2147483648
    %v1209 = vsel %vm1207, %v1208, %v1206
    %v1210 = vrsqrt.pop %v1190
    %v1211 = vmul.f32 %v1190, %v1210
    %vm1212 = vcmp.eq.f32.partialorder %v1190, inf
    %v1213 = vsel %vm1212, %v1190, %v1211
    %vm1214 = vcmp.eq.f32.partialorder %v1190, 0.0
    %v1215 = vand.u32 %v1190, 2147483648
    %v1216 = vsel %vm1214, %v1215, %v1213
    %v1217 = vrsqrt.pop %v1191
    %v1218 = vmul.f32 %v1191, %v1217
    %vm1219 = vcmp.eq.f32.partialorder %v1191, inf
    %v1220 = vsel %vm1219, %v1191, %v1218
    %vm1221 = vcmp.eq.f32.partialorder %v1191, 0.0
    %v1222 = vand.u32 %v1191, 2147483648
    %v1223 = vsel %vm1221, %v1222, %v1220
    %v1224 = vrsqrt.pop %v1192
    %v1225 = vmul.f32 %v1192, %v1224
    %vm1226 = vcmp.eq.f32.partialorder %v1192, inf
    %v1227 = vsel %vm1226, %v1192, %v1225
    %vm1228 = vcmp.eq.f32.partialorder %v1192, 0.0
    %v1229 = vand.u32 %v1192, 2147483648
    %v1230 = vsel %vm1228, %v1229, %v1227
    %v1231 = vrsqrt.pop %v1193
    %v1232 = vmul.f32 %v1193, %v1231
    %vm1233 = vcmp.eq.f32.partialorder %v1193, inf
    %v1234 = vsel %vm1233, %v1193, %v1232
    %vm1235 = vcmp.eq.f32.partialorder %v1193, 0.0
    %v1236 = vand.u32 %v1193, 2147483648
    %v1237 = vsel %vm1235, %v1236, %v1234
    %v1238 = vrsqrt.pop %v1194
    %v1239 = vmul.f32 %v1194, %v1238
    %vm1240 = vcmp.eq.f32.partialorder %v1194, inf
    %v1241 = vsel %vm1240, %v1194, %v1239
    %vm1242 = vcmp.eq.f32.partialorder %v1194, 0.0
    %v1243 = vand.u32 %v1194, 2147483648
    %v1244 = vsel %vm1242, %v1243, %v1241
    %v1245 = vrsqrt.pop %v1195
    %v1246 = vmul.f32 %v1195, %v1245
    %vm1247 = vcmp.eq.f32.partialorder %v1195, inf
    %v1248 = vsel %vm1247, %v1195, %v1246
    %vm1249 = vcmp.eq.f32.partialorder %v1195, 0.0
    %v1250 = vand.u32 %v1195, 2147483648
    %v1251 = vsel %vm1249, %v1250, %v1248
    %v1252 = vadd.f32 %v1202, 1e-06
    %v1253 = vadd.f32 %v1209, 1e-06
    %v1254 = vadd.f32 %v1216, 1e-06
    %v1255 = vadd.f32 %v1223, 1e-06
    %v1256 = vadd.f32 %v1230, 1e-06
    %v1257 = vadd.f32 %v1237, 1e-06
    %v1258 = vadd.f32 %v1244, 1e-06
    %v1259 = vadd.f32 %v1251, 1e-06
    %v1260 = vrcp.pop %v1252
    %v1261 = vmul.f32 1.0, %v1260
    %v1262 = vrcp.pop %v1253
    %v1263 = vmul.f32 1.0, %v1262
    %v1264 = vrcp.pop %v1254
    %v1265 = vmul.f32 1.0, %v1264
    %v1266 = vrcp.pop %v1255
    %v1267 = vmul.f32 1.0, %v1266
    %v1268 = vrcp.pop %v1256
    %v1269 = vmul.f32 1.0, %v1268
    %v1270 = vrcp.pop %v1257
    %v1271 = vmul.f32 1.0, %v1270
    %v1272 = vrcp.pop %v1258
    %v1273 = vmul.f32 1.0, %v1272
    %v1274 = vrcp.pop %v1259
    %v1275 = vmul.f32 1.0, %v1274
    %v1276 = vmul.f32 %v1156, %v1261
    %v1277 = vmul.f32 %v1157, %v1263
    %v1278 = vmul.f32 %v1158, %v1265
    %v1279 = vmul.f32 %v1159, %v1267
    %v1280 = vmul.f32 %v1160, %v1269
    %v1281 = vmul.f32 %v1161, %v1271
    %v1282 = vmul.f32 %v1162, %v1273
    %v1283 = vmul.f32 %v1163, %v1275
    %v1284 = vlaneseq
    %v1285 = vshrl.u32 %v1284, 7
    %v1286 = vsub.s32 1, %v1285
    %v1287 = vrot.slane %v59, %v1286
    %v1288 = vmul.f32 %v1287, %v1276
    %v1289 = vmul.f32 %v1287, %v1277
    %v1290 = vmul.f32 %v1287, %v1278
    %v1291 = vmul.f32 %v1287, %v1279
    %v1292 = vmul.f32 %v1287, %v1280
    %v1293 = vmul.f32 %v1287, %v1281
    %v1294 = vmul.f32 %v1287, %v1282
    %v1295 = vmul.f32 %v1287, %v1283
    %v1296 = vlaneseq
    %v1297 = vshrl.u32 %v1296, 7
    %v1298 = vsub.s32 2, %v1297
    %v1299 = vrot.slane %v59, %v1298
    %v1300 = vadd.f32 %v1288, %v1299
    %v1301 = vadd.f32 %v1289, %v1299
    %v1302 = vadd.f32 %v1290, %v1299
    %v1303 = vadd.f32 %v1291, %v1299
    %v1304 = vadd.f32 %v1292, %v1299
    %v1305 = vadd.f32 %v1293, %v1299
    %v1306 = vadd.f32 %v1294, %v1299
    %v1307 = vadd.f32 %v1295, %v1299
    %v1308 = vtanh.pop %v1300
    %v1309 = vtanh.pop %v1301
    %v1310 = vtanh.pop %v1302
    %v1311 = vtanh.pop %v1303
    %v1312 = vtanh.pop %v1304
    %v1313 = vtanh.pop %v1305
    %v1314 = vtanh.pop %v1306
    %v1315 = vtanh.pop %v1307
    %1316 = vst [vmem:[#allocation7] sm:$0xff] %v1308
    %1317 = vst [vmem:[#allocation7 + $0x8] sm:$0xff] %v1309
    %1318 = vst [vmem:[#allocation7 + $0x10] sm:$0xff] %v1310
    %1319 = vst [vmem:[#allocation7 + $0x18] sm:$0xff] %v1311
    %1320 = vst [vmem:[#allocation7 + $0x20] sm:$0xff] %v1312
    %1321 = vst [vmem:[#allocation7 + $0x28] sm:$0xff] %v1313
    %1322 = vst [vmem:[#allocation7 + $0x30] sm:$0xff] %v1314
    %1323 = vst [vmem:[#allocation7 + $0x38] sm:$0xff] %v1315
    // Predicated region
    $region30: #{shared_state_embedding_fwd.1} parent=1 // pred_check
      _
    $region31: #{shared_state_embedding_fwd.1} parent=1 // pred_check_branch
      %1325 = sbr.rel (0) target = $region33
    $region32: #{shared_state_embedding_fwd.1} parent=1 // pred_region
      %s1327 = ssub.s32 1024, 1024
      %1328 = vsyncadd [#allocation4], %s1327
      %s1329 = sshll.u32 [#allocation7], 4
      %s1330 = int_to_ptr.vmem [resolvable:$true] %s1329
      %1335 = dma.vmem_to_hbm [thread:$0]  %s1330, 1024, %s5, [#allocation4], 128, 128, 8
    $region33: #{shared_state_embedding_fwd.1} parent=1 // pred_fallthru
      _
    // Predicated region
    $region34: #{shared_state_embedding_fwd.1} parent=1 // pred_check
      _
    $region35: #{shared_state_embedding_fwd.1} parent=1 // pred_check_branch
      %1337 = sbr.rel (0) target = $region37
    $region36: #{shared_state_embedding_fwd.1} parent=1 // pred_region
      %1338 = dma.done [#allocation4], 1024
    $region37: #{shared_state_embedding_fwd.1} parent=1 // pred_fallthru
      _
    %1339 = vsyncpa [#allocation3], 1
    %1340 = vsyncpa [#allocation6], 1
    %1341 = vsyncpa [#allocation4], 1

</llo_original>
